<compile_context>
chip_gen: v6e
topology: v6e:2x2x1
jax: 0.10.0
libtpu: 0.0.40
codegen_flags: <defaults>
</compile_context>

<pallas_src>
import functools

import jax
import jax.numpy as jnp
from jax.experimental import pallas as pl
from jax.experimental.pallas import tpu as pltpu

NEG_SLOPE = 0.01   # nn.LeakyReLU() default negative_slope
HIDDEN = 100       # fc1 output features in the PyTorch module
H_PAD = 128        # lane-padded hidden dim (exact zero padding)
TB_MAX = 1024      # batch tile rows (safe within default scoped VMEM on all chips)


def _mlp_kernel(x_ref, w1_ref, b1_ref, w2_ref, b2_ref, o_ref):
    # fc1 on the MXU: (TB, D) @ (D, 128) -> f32 accumulate
    h = jnp.dot(x_ref[...], w1_ref[...], preferred_element_type=jnp.float32)
    h = h + b1_ref[...]
    # grad_reverse: identity in forward.  Dropout1d: identity in eval mode.
    # LeakyReLU (default negative_slope = 0.01)
    h = jnp.where(h > 0, h, NEG_SLOPE * h)
    # fc2: a (TB,128)x(128,1) matmul would use 1/256 MXU output columns; do it on
    # the VPU (multiply) + XLU (lane reduction) instead — those slots are free
    # while the MXU works on the next tile's fc1.
    out = jnp.sum(h * w2_ref[...], axis=-1, keepdims=True)
    o_ref[...] = out + b2_ref[0, 0]


@functools.partial(jax.jit)
def domain_classifier_mlp_forward(x, w1p, b1p, w2p, b2):
    """x: (B, D) f32; w1p: (D, H_PAD); b1p: (1, H_PAD); w2p: (1, H_PAD); b2: (1, 1)."""
    B, D = x.shape
    h_pad = w1p.shape[1]
    assert w1p.shape == (D, h_pad) and b1p.shape == (1, h_pad)
    assert w2p.shape == (1, h_pad) and b2.shape == (1, 1)

    tb = B if B <= TB_MAX else TB_MAX          # tb == B or a multiple of 8
    grid = (pl.cdiv(B, tb),)

    flops = 2 * B * D * h_pad + 4 * B * h_pad
    bytes_accessed = (B * D + D * h_pad + 2 * h_pad + B + 1) * 4

    return pl.pallas_call(
        _mlp_kernel,
        out_shape=jax.ShapeDtypeStruct((B, 1), jnp.float32),
        grid_spec=pltpu.PrefetchScalarGridSpec(
            num_scalar_prefetch=0,
            grid=grid,
            in_specs=[
                # x: tiled along the batch, pipelined HBM->VMEM
                pl.BlockSpec((tb, D), lambda i: (i, 0)),
                # weights/biases: constant index_map -> stay VMEM-resident
                pl.BlockSpec((D, h_pad), lambda i: (0, 0)),
                pl.BlockSpec((1, h_pad), lambda i: (0, 0)),
                pl.BlockSpec((1, h_pad), lambda i: (0, 0)),
                # b2 scalar lives in SMEM (no padded VMEM tile / extra DMA stream)
                pl.BlockSpec(memory_space=pltpu.MemorySpace.SMEM),
            ],
            out_specs=pl.BlockSpec((tb, 1), lambda i: (i, 0)),
        ),
        compiler_params=pltpu.CompilerParams(
            dimension_semantics=("parallel",)),
        cost_estimate=pl.CostEstimate(
            flops=flops, transcendentals=0, bytes_accessed=bytes_accessed),
    )(x, w1p, b1p, w2p, b2)


def init_params(key, input_dim=1200, hidden=HIDDEN):
    """PyTorch-style uniform(-1/sqrt(fan_in), 1/sqrt(fan_in)) init, (in, out) layout."""
    k1, k2, k3, k4 = jax.random.split(key, 4)
    bound1 = 1.0 / jnp.sqrt(input_dim)
    bound2 = 1.0 / jnp.sqrt(hidden)
    w1 = jax.random.uniform(k1, (input_dim, hidden), jnp.float32, -bound1, bound1)
    b1 = jax.random.uniform(k2, (1, hidden), jnp.float32, -bound1, bound1)
    w2 = jax.random.uniform(k3, (hidden, 1), jnp.float32, -bound2, bound2)
    b2 = jax.random.uniform(k4, (1, 1), jnp.float32, -bound2, bound2)
    return w1, b1, w2, b2


def pad_params(w1, b1, w2, b2, h_pad=H_PAD):
    """Zero-pad hidden dim 100 -> 128 (exact) and lay w2 out as a (1, H_PAD) row."""
    D, H = w1.shape
    assert H <= h_pad
    w1p = jnp.zeros((D, h_pad), jnp.float32).at[:, :H].set(w1)
    b1p = jnp.zeros((1, h_pad), jnp.float32).at[:, :H].set(b1)
    w2p = jnp.zeros((1, h_pad), jnp.float32).at[:, :H].set(w2.reshape(1, H))
    return w1p, b1p, w2p, b2


def reference_forward(x, w1, b1, w2, b2):
    h = x @ w1 + b1
    h = jnp.where(h > 0, h, NEG_SLOPE * h)
    return h @ w2 + b2


if __name__ == "__main__":
    key = jax.random.PRNGKey(0)
    kx, kp = jax.random.split(key)

    B, D = 8, 1200                      # module default input_dim=1200
    x = jax.random.normal(kx, (B, D), jnp.float32)
    w1, b1, w2, b2 = init_params(kp, input_dim=D, hidden=HIDDEN)
    w1p, b1p, w2p, b2p = pad_params(w1, b1, w2, b2)

    out = domain_classifier_mlp_forward(x, w1p, b1p, w2p, b2p)
    out = jax.block_until_ready(out)

    ref = reference_forward(x, w1, b1, w2, b2)
    assert out.shape == (B, 1), out.shape
    assert jnp.allclose(out, ref, atol=1e-4, rtol=1e-4), (
        f"max abs err = {jnp.max(jnp.abs(out - ref))}")

    print("KERNEL_OK")
</pallas_src>

<mosaic_0001>
module attributes {stable_mosaic.version = 11 : i64} {
  func.func @_mlp_kernel(%arg0: i32, %arg1: memref<8x1200xf32, #tpu.memory_space<vmem>>, %arg2: memref<1200x128xf32, #tpu.memory_space<vmem>>, %arg3: memref<1x128xf32, #tpu.memory_space<vmem>>, %arg4: memref<1x128xf32, #tpu.memory_space<vmem>>, %arg5: memref<1x1xf32, #tpu.memory_space<smem>>, %arg6: memref<8x1xf32, #tpu.memory_space<vmem>>) attributes {dimension_semantics = [#tpu.dimension_semantics<parallel>], iteration_bounds = array<i64: 1>, scalar_prefetch = 0 : i64, scratch_operands = 0 : i64, tpu.core_type = #tpu.core_type<tc>, window_params = [{transform_indices = @transform_0, window_bounds = array<i64: 8, 1200>}, {pipeline_mode = #tpu.pipeline_mode<synchronous>, transform_indices = @transform_1, window_bounds = array<i64: 1200, 128>}, {pipeline_mode = #tpu.pipeline_mode<synchronous>, transform_indices = @transform_2, window_bounds = array<i64: 1, 128>}, {pipeline_mode = #tpu.pipeline_mode<synchronous>, transform_indices = @transform_3, window_bounds = array<i64: 1, 128>}, {transform_indices = @transform_4, window_bounds = array<i64: 1, 1>}, {transform_indices = @transform_5, window_bounds = array<i64: 8, 1>}]} {
    %c0 = arith.constant 0 : index
    %c0_0 = arith.constant 0 : index
    %0 = vector.load %arg1[%c0, %c0_0] : memref<8x1200xf32, #tpu.memory_space<vmem>>, vector<8x1200xf32>
    %c0_1 = arith.constant 0 : index
    %c0_2 = arith.constant 0 : index
    %1 = vector.load %arg2[%c0_1, %c0_2] : memref<1200x128xf32, #tpu.memory_space<vmem>>, vector<1200x128xf32>
    %cst = arith.constant dense<0.000000e+00> : vector<8x128xf32>
    %2 = tpu.matmul %0, %1, %cst {dimension_numbers = #tpu.dot_dimension_numbers<[1], [0], [0], [1], [0, 0, 1, 1], [], []>} : vector<8x1200xf32>, vector<1200x128xf32>, vector<8x128xf32> -> vector<8x128xf32>
    %c0_3 = arith.constant 0 : index
    %c0_4 = arith.constant 0 : index
    %3 = vector.load %arg3[%c0_3, %c0_4] : memref<1x128xf32, #tpu.memory_space<vmem>>, vector<1x128xf32>
    %4 = vector.broadcast %3 : vector<1x128xf32> to vector<8x128xf32>
    %5 = arith.addf %2, %4 : vector<8x128xf32>
    %cst_5 = arith.constant 0.000000e+00 : f32
    %6 = vector.broadcast %cst_5 : f32 to vector<8x128xf32>
    %7 = arith.cmpf ogt, %5, %6 : vector<8x128xf32>
    %cst_6 = arith.constant 0.00999999977 : f32
    %8 = vector.broadcast %cst_6 : f32 to vector<8x128xf32>
    %9 = arith.mulf %8, %5 : vector<8x128xf32>
    %10 = arith.select %7, %5, %9 : vector<8x128xi1>, vector<8x128xf32>
    %c0_7 = arith.constant 0 : index
    %c0_8 = arith.constant 0 : index
    %11 = vector.load %arg4[%c0_7, %c0_8] : memref<1x128xf32, #tpu.memory_space<vmem>>, vector<1x128xf32>
    %12 = vector.broadcast %11 : vector<1x128xf32> to vector<8x128xf32>
    %13 = arith.mulf %10, %12 : vector<8x128xf32>
    %cst_9 = arith.constant dense<0.000000e+00> : vector<8xf32>
    %14 = vector.multi_reduction <add>, %13, %cst_9 [1] : vector<8x128xf32> to vector<8xf32>
    %15 = vector.shape_cast %14 : vector<8xf32> to vector<8x1xf32>
    %c0_10 = arith.constant 0 : index
    %c0_11 = arith.constant 0 : index
    %16 = memref.load %arg5[%c0_10, %c0_11] : memref<1x1xf32, #tpu.memory_space<smem>>
    %17 = vector.broadcast %16 : f32 to vector<8x1xf32>
    %18 = arith.addf %15, %17 : vector<8x1xf32>
    %c0_12 = arith.constant 0 : index
    %c0_13 = arith.constant 0 : index
    %19 = vector.load %arg6[%c0_12, %c0_13] : memref<8x1xf32, #tpu.memory_space<vmem>>, vector<8x1xf32>
    tpu.vector_store %arg6[%c0_12, %c0_13], %18 {strides = array<i32>} : memref<8x1xf32, #tpu.memory_space<vmem>>, vector<8x1xf32>,
    return
  }
  func.func @transform_0(%arg0: i32) -> (i32, i32) {
    %c0_i32 = arith.constant 0 : i32
    %c0_i32_0 = arith.constant 0 : i32
    return %arg0, %c0_i32 : i32, i32
  }
  func.func @transform_1(%arg0: i32) -> (i32, i32) {
    %c0_i32 = arith.constant 0 : i32
    %c0_i32_0 = arith.constant 0 : i32
    %c0_i32_1 = arith.constant 0 : i32
    return %c0_i32, %c0_i32_0 : i32, i32
  }
  func.func @transform_2(%arg0: i32) -> (i32, i32) {
    %c0_i32 = arith.constant 0 : i32
    %c0_i32_0 = arith.constant 0 : i32
    %c0_i32_1 = arith.constant 0 : i32
    return %c0_i32, %c0_i32_0 : i32, i32
  }
  func.func @transform_3(%arg0: i32) -> (i32, i32) {
    %c0_i32 = arith.constant 0 : i32
    %c0_i32_0 = arith.constant 0 : i32
    %c0_i32_1 = arith.constant 0 : i32
    return %c0_i32, %c0_i32_0 : i32, i32
  }
  func.func @transform_4(%arg0: i32) -> (i32, i32) {
    %c0_i32 = arith.constant 0 : i32
    %c0_i32_0 = arith.constant 0 : i32
    %c0_i32_1 = arith.constant 0 : i32
    return %c0_i32, %c0_i32_0 : i32, i32
  }
  func.func @transform_5(%arg0: i32) -> (i32, i32) {
    %c0_i32 = arith.constant 0 : i32
    %c0_i32_0 = arith.constant 0 : i32
    return %arg0, %c0_i32 : i32, i32
  }
}

</mosaic_0001>

<llo_original>
// kernel: domain_classifier_mlp_forward.1
$region0: #{domain_classifier_mlp_forward.1}
  #allocation0 [shape = 'u32[]', space=smem, size = 0x4, offset = 0x4, fixed_abs, tag = 'smem constant byte address 0x4 - core index']
  #allocation1 [shape = 'u32[144,128]{1,0:T(1,128)}', space=vmem, size = 0x12000, scoped, tag = 'internal scratch']
  #allocation2 [shape = 'f32[1,1]{1,0:T(1,128)S(6)}', space=smem, size = 0x200, scoped, tag = 'scoped memory for domain_classifier_mlp_forward.1']
  %s0 = inlined_call_operand.hbm [shape: f32[8,1200], index: 0, kind: input, shape index: {}]
  %s1 = inlined_call_operand.hbm [shape: f32[1200,128], index: 1, kind: input, shape index: {}]
  %s2 = inlined_call_operand.vmem [shape: f32[1,128], index: 2, kind: input, shape index: {}]
  %s3 = inlined_call_operand.vmem [shape: f32[1,128], index: 3, kind: input, shape index: {}]
  %s4 = inlined_call_operand.<no memory space> [shape: f32[1,1], index: 4, kind: input, shape index: {}]
  %s5 = inlined_call_operand.vmem [shape: f32[8,1], index: 5, kind: output, shape index: {}]
  %s6 = sld [smem:[#allocation0]]
  $region38: #{domain_classifier_mlp_forward.1} parent=0
    _
  %s8 = ssub.s32 1, %s6
  %s9 = scalar_select 0, %s8, %s6
  %10 = sst [smem:[#allocation2]] %s4
  $region1: #{domain_classifier_mlp_forward.1} parent=0
    #allocation3 [shape = 'u8[40960]{0}', space=vmem, size = 0xa000, scoped, tag = 'input window, operand 0, single buffered']
    #allocation4 [shape = 's32[1]{0}', space=sflag, size = 0x4, scoped, tag = 'scoped memory for domain_classifier_mlp_forward.1']
    #allocation5 [shape = 'u8[614400]{0}', space=vmem, size = 0x96000, scoped, tag = 'input window, operand 1, single buffered']
    #allocation6 [shape = 's32[1]{0}', space=sflag, size = 0x4, scoped, tag = 'scoped memory for domain_classifier_mlp_forward.1']
    %11 = vsyncpa [#allocation4], 0
    %12 = vsyncpa [#allocation6], 0
    // Predicated region
    $region2: #{domain_classifier_mlp_forward.1} parent=1 // pred_check
      _
    $region3: #{domain_classifier_mlp_forward.1} parent=1 // pred_check_branch
      %14 = sbr.rel (0) target = $region5
    $region4: #{domain_classifier_mlp_forward.1} parent=1 // pred_region
      %s16 = ssub.s32 1280, 1280
      %17 = vsyncadd [#allocation4], %s16
      %s19 = sshll.u32 [#allocation3], 4
      %s20 = int_to_ptr.vmem [resolvable:$true] %s19
      %22 = dma.hbm_to_vmem [thread:$0]  %s0, 1280, %s20, [#allocation4]
    $region5: #{domain_classifier_mlp_forward.1} parent=1 // pred_fallthru
      _
    // Predicated region
    $region6: #{domain_classifier_mlp_forward.1} parent=1 // pred_check
      _
    $region7: #{domain_classifier_mlp_forward.1} parent=1 // pred_check_branch
      %24 = sbr.rel (0) target = $region9
    $region8: #{domain_classifier_mlp_forward.1} parent=1 // pred_region
      %s26 = ssub.s32 19200, 19200
      %27 = vsyncadd [#allocation6], %s26
      %s28 = sshll.u32 [#allocation5], 4
      %s29 = int_to_ptr.vmem [resolvable:$true] %s28
      %34 = dma.hbm_to_vmem [thread:$0]  %s1, 19200, %s29, [#allocation6], 128, 128, 8
    $region9: #{domain_classifier_mlp_forward.1} parent=1 // pred_fallthru
      _
    // Predicated region
    $region10: #{domain_classifier_mlp_forward.1} parent=1 // pred_check
      _
    $region11: #{domain_classifier_mlp_forward.1} parent=1 // pred_check_branch
      %36 = sbr.rel (0) target = $region13
    $region12: #{domain_classifier_mlp_forward.1} parent=1 // pred_region
      _
    $region13: #{domain_classifier_mlp_forward.1} parent=1 // pred_fallthru
      _
    // Predicated region
    $region14: #{domain_classifier_mlp_forward.1} parent=1 // pred_check
      _
    $region15: #{domain_classifier_mlp_forward.1} parent=1 // pred_check_branch
      %38 = sbr.rel (0) target = $region17
    $region16: #{domain_classifier_mlp_forward.1} parent=1 // pred_region
      _
    $region17: #{domain_classifier_mlp_forward.1} parent=1 // pred_fallthru
      _
    // Predicated region
    $region18: #{domain_classifier_mlp_forward.1} parent=1 // pred_check
      _
    $region19: #{domain_classifier_mlp_forward.1} parent=1 // pred_check_branch
      %40 = sbr.rel (0) target = $region21
    $region20: #{domain_classifier_mlp_forward.1} parent=1 // pred_region
      _
    $region21: #{domain_classifier_mlp_forward.1} parent=1 // pred_fallthru
      _
    // Predicated region
    $region22: #{domain_classifier_mlp_forward.1} parent=1 // pred_check
      _
    $region23: #{domain_classifier_mlp_forward.1} parent=1 // pred_check_branch
      %42 = sbr.rel (0) target = $region25
    $region24: #{domain_classifier_mlp_forward.1} parent=1 // pred_region
      %43 = dma.done [#allocation4], 1280
    $region25: #{domain_classifier_mlp_forward.1} parent=1 // pred_fallthru
      _
    // Predicated region
    $region26: #{domain_classifier_mlp_forward.1} parent=1 // pred_check
      _
    $region27: #{domain_classifier_mlp_forward.1} parent=1 // pred_check_branch
      %45 = sbr.rel (0) target = $region29
    $region28: #{domain_classifier_mlp_forward.1} parent=1 // pred_region
      %46 = dma.done [#allocation6], 19200
    $region29: #{domain_classifier_mlp_forward.1} parent=1 // pred_fallthru
      _
    %v47 = vld [vmem:[#allocation3] sm:$0xff]
    %v48 = vld [vmem:[#allocation3 + $0x8] sm:$0xff]
    %v49 = vld [vmem:[#allocation3 + $0x10] sm:$0xff]
    %v50 = vld [vmem:[#allocation3 + $0x18] sm:$0xff]
    %v51 = vld [vmem:[#allocation3 + $0x20] sm:$0xff]
    %v52 = vld [vmem:[#allocation3 + $0x28] sm:$0xff]
    %v53 = vld [vmem:[#allocation3 + $0x30] sm:$0xff]
    %v54 = vld [vmem:[#allocation3 + $0x38] sm:$0xff]
    %v55 = vld [vmem:[#allocation3 + $0x40] sm:$0xff]
    %v56 = vld [vmem:[#allocation3 + $0x48] sm:$0xff]
    %v57 = vld [vmem:[#allocation5] sm:$0xff]
    %v58 = vld [vmem:[#allocation5 + $0x8] sm:$0xff]
    %v59 = vld [vmem:[#allocation5 + $0x10] sm:$0xff]
    %v60 = vld [vmem:[#allocation5 + $0x18] sm:$0xff]
    %v61 = vld [vmem:[#allocation5 + $0x20] sm:$0xff]
    %v62 = vld [vmem:[#allocation5 + $0x28] sm:$0xff]
    %v63 = vld [vmem:[#allocation5 + $0x30] sm:$0xff]
    %v64 = vld [vmem:[#allocation5 + $0x38] sm:$0xff]
    %v65 = vld [vmem:[#allocation5 + $0x40] sm:$0xff]
    %v66 = vld [vmem:[#allocation5 + $0x48] sm:$0xff]
    %v67 = vld [vmem:[#allocation5 + $0x50] sm:$0xff]
    %v68 = vld [vmem:[#allocation5 + $0x58] sm:$0xff]
    %v69 = vld [vmem:[#allocation5 + $0x60] sm:$0xff]
    %v70 = vld [vmem:[#allocation5 + $0x68] sm:$0xff]
    %v71 = vld [vmem:[#allocation5 + $0x70] sm:$0xff]
    %v72 = vld [vmem:[#allocation5 + $0x78] sm:$0xff]
    %v73 = vld [vmem:[#allocation5 + $0x80] sm:$0xff]
    %v74 = vld [vmem:[#allocation5 + $0x88] sm:$0xff]
    %v75 = vld [vmem:[#allocation5 + $0x90] sm:$0xff]
    %v76 = vld [vmem:[#allocation5 + $0x98] sm:$0xff]
    %v77 = vld [vmem:[#allocation5 + $0xa0] sm:$0xff]
    %v78 = vld [vmem:[#allocation5 + $0xa8] sm:$0xff]
    %v79 = vld [vmem:[#allocation5 + $0xb0] sm:$0xff]
    %v80 = vld [vmem:[#allocation5 + $0xb8] sm:$0xff]
    %v81 = vld [vmem:[#allocation5 + $0xc0] sm:$0xff]
    %v82 = vld [vmem:[#allocation5 + $0xc8] sm:$0xff]
    %v83 = vld [vmem:[#allocation5 + $0xd0] sm:$0xff]
    %v84 = vld [vmem:[#allocation5 + $0xd8] sm:$0xff]
    %v85 = vld [vmem:[#allocation5 + $0xe0] sm:$0xff]
    %v86 = vld [vmem:[#allocation5 + $0xe8] sm:$0xff]
    %v87 = vld [vmem:[#allocation5 + $0xf0] sm:$0xff]
    %v88 = vld [vmem:[#allocation5 + $0xf8] sm:$0xff]
    %v89 = vld [vmem:[#allocation5 + $0x100] sm:$0xff]
    %v90 = vld [vmem:[#allocation5 + $0x108] sm:$0xff]
    %v91 = vld [vmem:[#allocation5 + $0x110] sm:$0xff]
    %v92 = vld [vmem:[#allocation5 + $0x118] sm:$0xff]
    %v93 = vld [vmem:[#allocation5 + $0x120] sm:$0xff]
    %v94 = vld [vmem:[#allocation5 + $0x128] sm:$0xff]
    %v95 = vld [vmem:[#allocation5 + $0x130] sm:$0xff]
    %v96 = vld [vmem:[#allocation5 + $0x138] sm:$0xff]
    %v97 = vld [vmem:[#allocation5 + $0x140] sm:$0xff]
    %v98 = vld [vmem:[#allocation5 + $0x148] sm:$0xff]
    %v99 = vld [vmem:[#allocation5 + $0x150] sm:$0xff]
    %v100 = vld [vmem:[#allocation5 + $0x158] sm:$0xff]
    %v101 = vld [vmem:[#allocation5 + $0x160] sm:$0xff]
    %v102 = vld [vmem:[#allocation5 + $0x168] sm:$0xff]
    %v103 = vld [vmem:[#allocation5 + $0x170] sm:$0xff]
    %v104 = vld [vmem:[#allocation5 + $0x178] sm:$0xff]
    %v105 = vld [vmem:[#allocation5 + $0x180] sm:$0xff]
    %v106 = vld [vmem:[#allocation5 + $0x188] sm:$0xff]
    %v107 = vld [vmem:[#allocation5 + $0x190] sm:$0xff]
    %v108 = vld [vmem:[#allocation5 + $0x198] sm:$0xff]
    %v109 = vld [vmem:[#allocation5 + $0x1a0] sm:$0xff]
    %v110 = vld [vmem:[#allocation5 + $0x1a8] sm:$0xff]
    %v111 = vld [vmem:[#allocation5 + $0x1b0] sm:$0xff]
    %v112 = vld [vmem:[#allocation5 + $0x1b8] sm:$0xff]
    %v113 = vld [vmem:[#allocation5 + $0x1c0] sm:$0xff]
    %v114 = vld [vmem:[#allocation5 + $0x1c8] sm:$0xff]
    %v115 = vld [vmem:[#allocation5 + $0x1d0] sm:$0xff]
    %v116 = vld [vmem:[#allocation5 + $0x1d8] sm:$0xff]
    %v117 = vld [vmem:[#allocation5 + $0x1e0] sm:$0xff]
    %v118 = vld [vmem:[#allocation5 + $0x1e8] sm:$0xff]
    %v119 = vld [vmem:[#allocation5 + $0x1f0] sm:$0xff]
    %v120 = vld [vmem:[#allocation5 + $0x1f8] sm:$0xff]
    %v121 = vld [vmem:[#allocation5 + $0x200] sm:$0xff]
    %v122 = vld [vmem:[#allocation5 + $0x208] sm:$0xff]
    %v123 = vld [vmem:[#allocation5 + $0x210] sm:$0xff]
    %v124 = vld [vmem:[#allocation5 + $0x218] sm:$0xff]
    %v125 = vld [vmem:[#allocation5 + $0x220] sm:$0xff]
    %v126 = vld [vmem:[#allocation5 + $0x228] sm:$0xff]
    %v127 = vld [vmem:[#allocation5 + $0x230] sm:$0xff]
    %v128 = vld [vmem:[#allocation5 + $0x238] sm:$0xff]
    %v129 = vld [vmem:[#allocation5 + $0x240] sm:$0xff]
    %v130 = vld [vmem:[#allocation5 + $0x248] sm:$0xff]
    %v131 = vld [vmem:[#allocation5 + $0x250] sm:$0xff]
    %v132 = vld [vmem:[#allocation5 + $0x258] sm:$0xff]
    %v133 = vld [vmem:[#allocation5 + $0x260] sm:$0xff]
    %v134 = vld [vmem:[#allocation5 + $0x268] sm:$0xff]
    %v135 = vld [vmem:[#allocation5 + $0x270] sm:$0xff]
    %v136 = vld [vmem:[#allocation5 + $0x278] sm:$0xff]
    %v137 = vld [vmem:[#allocation5 + $0x280] sm:$0xff]
    %v138 = vld [vmem:[#allocation5 + $0x288] sm:$0xff]
    %v139 = vld [vmem:[#allocation5 + $0x290] sm:$0xff]
    %v140 = vld [vmem:[#allocation5 + $0x298] sm:$0xff]
    %v141 = vld [vmem:[#allocation5 + $0x2a0] sm:$0xff]
    %v142 = vld [vmem:[#allocation5 + $0x2a8] sm:$0xff]
    %v143 = vld [vmem:[#allocation5 + $0x2b0] sm:$0xff]
    %v144 = vld [vmem:[#allocation5 + $0x2b8] sm:$0xff]
    %v145 = vld [vmem:[#allocation5 + $0x2c0] sm:$0xff]
    %v146 = vld [vmem:[#allocation5 + $0x2c8] sm:$0xff]
    %v147 = vld [vmem:[#allocation5 + $0x2d0] sm:$0xff]
    %v148 = vld [vmem:[#allocation5 + $0x2d8] sm:$0xff]
    %v149 = vld [vmem:[#allocation5 + $0x2e0] sm:$0xff]
    %v150 = vld [vmem:[#allocation5 + $0x2e8] sm:$0xff]
    %v151 = vld [vmem:[#allocation5 + $0x2f0] sm:$0xff]
    %v152 = vld [vmem:[#allocation5 + $0x2f8] sm:$0xff]
    %v153 = vld [vmem:[#allocation5 + $0x300] sm:$0xff]
    %v154 = vld [vmem:[#allocation5 + $0x308] sm:$0xff]
    %v155 = vld [vmem:[#allocation5 + $0x310] sm:$0xff]
    %v156 = vld [vmem:[#allocation5 + $0x318] sm:$0xff]
    %v157 = vld [vmem:[#allocation5 + $0x320] sm:$0xff]
    %v158 = vld [vmem:[#allocation5 + $0x328] sm:$0xff]
    %v159 = vld [vmem:[#allocation5 + $0x330] sm:$0xff]
    %v160 = vld [vmem:[#allocation5 + $0x338] sm:$0xff]
    %v161 = vld [vmem:[#allocation5 + $0x340] sm:$0xff]
    %v162 = vld [vmem:[#allocation5 + $0x348] sm:$0xff]
    %v163 = vld [vmem:[#allocation5 + $0x350] sm:$0xff]
    %v164 = vld [vmem:[#allocation5 + $0x358] sm:$0xff]
    %v165 = vld [vmem:[#allocation5 + $0x360] sm:$0xff]
    %v166 = vld [vmem:[#allocation5 + $0x368] sm:$0xff]
    %v167 = vld [vmem:[#allocation5 + $0x370] sm:$0xff]
    %v168 = vld [vmem:[#allocation5 + $0x378] sm:$0xff]
    %v169 = vld [vmem:[#allocation5 + $0x380] sm:$0xff]
    %v170 = vld [vmem:[#allocation5 + $0x388] sm:$0xff]
    %v171 = vld [vmem:[#allocation5 + $0x390] sm:$0xff]
    %v172 = vld [vmem:[#allocation5 + $0x398] sm:$0xff]
    %v173 = vld [vmem:[#allocation5 + $0x3a0] sm:$0xff]
    %v174 = vld [vmem:[#allocation5 + $0x3a8] sm:$0xff]
    %v175 = vld [vmem:[#allocation5 + $0x3b0] sm:$0xff]
    %v176 = vld [vmem:[#allocation5 + $0x3b8] sm:$0xff]
    %v177 = vld [vmem:[#allocation5 + $0x3c0] sm:$0xff]
    %v178 = vld [vmem:[#allocation5 + $0x3c8] sm:$0xff]
    %v179 = vld [vmem:[#allocation5 + $0x3d0] sm:$0xff]
    %v180 = vld [vmem:[#allocation5 + $0x3d8] sm:$0xff]
    %v181 = vld [vmem:[#allocation5 + $0x3e0] sm:$0xff]
    %v182 = vld [vmem:[#allocation5 + $0x3e8] sm:$0xff]
    %v183 = vld [vmem:[#allocation5 + $0x3f0] sm:$0xff]
    %v184 = vld [vmem:[#allocation5 + $0x3f8] sm:$0xff]
    %v185 = vld [vmem:[#allocation5 + $0x400] sm:$0xff]
    %v186 = vld [vmem:[#allocation5 + $0x408] sm:$0xff]
    %v187 = vld [vmem:[#allocation5 + $0x410] sm:$0xff]
    %v188 = vld [vmem:[#allocation5 + $0x418] sm:$0xff]
    %v189 = vld [vmem:[#allocation5 + $0x420] sm:$0xff]
    %v190 = vld [vmem:[#allocation5 + $0x428] sm:$0xff]
    %v191 = vld [vmem:[#allocation5 + $0x430] sm:$0xff]
    %v192 = vld [vmem:[#allocation5 + $0x438] sm:$0xff]
    %v193 = vld [vmem:[#allocation5 + $0x440] sm:$0xff]
    %v194 = vld [vmem:[#allocation5 + $0x448] sm:$0xff]
    %v195 = vld [vmem:[#allocation5 + $0x450] sm:$0xff]
    %v196 = vld [vmem:[#allocation5 + $0x458] sm:$0xff]
    %v197 = vld [vmem:[#allocation5 + $0x460] sm:$0xff]
    %v198 = vld [vmem:[#allocation5 + $0x468] sm:$0xff]
    %v199 = vld [vmem:[#allocation5 + $0x470] sm:$0xff]
    %v200 = vld [vmem:[#allocation5 + $0x478] sm:$0xff]
    %v201 = vld [vmem:[#allocation5 + $0x480] sm:$0xff]
    %v202 = vld [vmem:[#allocation5 + $0x488] sm:$0xff]
    %v203 = vld [vmem:[#allocation5 + $0x490] sm:$0xff]
    %v204 = vld [vmem:[#allocation5 + $0x498] sm:$0xff]
    %v205 = vld [vmem:[#allocation5 + $0x4a0] sm:$0xff]
    %v206 = vld [vmem:[#allocation5 + $0x4a8] sm:$0xff]
    %v207 = vld [vmem:[%s2] sm:$0x1]
    %v209 = vlaneseq
    %v210 = vshrl.u32 %v209, 7
    %v211 = vsub.s32 0, %v210
    %v212 = vrot.slane %v207, %v211
    %vm214 = vcmask 392192
    %v216 = vsel %vm214, %v56, 0
    %218 = vmatprep.subr.mxu0 0.0
    %219 = vmatpush1.msra.mxu0 %v72
    %220 = vmatprep.subr.mxu0 0.0
    %221 = vmatpush1.msra.mxu0 %v71
    %222 = vmatprep.subr.mxu0 0.0
    %223 = vmatpush1.msra.mxu0 %v70
    %224 = vmatprep.subr.mxu0 0.0
    %225 = vmatpush1.msra.mxu0 %v69
    %226 = vmatprep.subr.mxu0 0.0
    %227 = vmatpush1.msra.mxu0 %v68
    %228 = vmatprep.subr.mxu0 0.0
    %229 = vmatpush1.msra.mxu0 %v67
    %230 = vmatprep.subr.mxu0 0.0
    %231 = vmatpush1.msra.mxu0 %v66
    %232 = vmatprep.subr.mxu0 0.0
    %233 = vmatpush1.msra.mxu0 %v65
    %234 = vmatprep.subr.mxu0 0.0
    %235 = vmatpush1.msra.mxu0 %v64
    %236 = vmatprep.subr.mxu0 0.0
    %237 = vmatpush1.msra.mxu0 %v63
    %238 = vmatprep.subr.mxu0 0.0
    %239 = vmatpush1.msra.mxu0 %v62
    %240 = vmatprep.subr.mxu0 0.0
    %241 = vmatpush1.msra.mxu0 %v61
    %242 = vmatprep.subr.mxu0 0.0
    %243 = vmatpush1.msra.mxu0 %v60
    %244 = vmatprep.subr.mxu0 0.0
    %245 = vmatpush1.msra.mxu0 %v59
    %246 = vmatprep.subr.mxu0 0.0
    %247 = vmatpush1.msra.mxu0 %v58
    %248 = vmatprep.subr.mxu0 0.0
    %249 = vmatpush1.msra.mxu0 %v57
    %250 = vmatprep.subr.mxu0 0.0
    %251 = vmatpush2.msra.mxu0 %v88
    %252 = vmatprep.subr.mxu0 0.0
    %253 = vmatpush2.msra.mxu0 %v87
    %254 = vmatprep.subr.mxu0 0.0
    %255 = vmatpush2.msra.mxu0 %v86
    %256 = vmatprep.subr.mxu0 0.0
    %257 = vmatpush2.msra.mxu0 %v85
    %258 = vmatprep.subr.mxu0 0.0
    %259 = vmatpush2.msra.mxu0 %v84
    %260 = vmatprep.subr.mxu0 0.0
    %261 = vmatpush2.msra.mxu0 %v83
    %262 = vmatprep.subr.mxu0 0.0
    %263 = vmatpush2.msra.mxu0 %v82
    %264 = vmatprep.subr.mxu0 0.0
    %265 = vmatpush2.msra.mxu0 %v81
    %266 = vmatprep.subr.mxu0 0.0
    %267 = vmatpush2.msra.mxu0 %v80
    %268 = vmatprep.subr.mxu0 0.0
    %269 = vmatpush2.msra.mxu0 %v79
    %270 = vmatprep.subr.mxu0 0.0
    %271 = vmatpush2.msra.mxu0 %v78
    %272 = vmatprep.subr.mxu0 0.0
    %273 = vmatpush2.msra.mxu0 %v77
    %274 = vmatprep.subr.mxu0 0.0
    %275 = vmatpush2.msra.mxu0 %v76
    %276 = vmatprep.subr.mxu0 0.0
    %277 = vmatpush2.msra.mxu0 %v75
    %278 = vmatprep.subr.mxu0 0.0
    %279 = vmatpush2.msra.mxu0 %v74
    %280 = vmatprep.subr.mxu0 0.0
    %281 = vmatpush2.msra.mxu0 %v73
    %282 = vmatprep.mubr.f32.mxu0 %v48
    %283 = vmatmul.mubr.f32.gmra.mxu0 %v47
    %v284 = vpop.f32.mrf.mxu0
    %v285 = vadd.f32 %v212, %v284
    %v286 = vpop.f32.mrf.mxu0
    %287 = vdwg.mxu0
    %288 = vmatprep.subr.mxu0 0.0
    %289 = vmatpush1.msra.mxu0 %v104
    %290 = vmatprep.subr.mxu0 0.0
    %291 = vmatpush1.msra.mxu0 %v103
    %292 = vmatprep.subr.mxu0 0.0
    %293 = vmatpush1.msra.mxu0 %v102
    %294 = vmatprep.subr.mxu0 0.0
    %295 = vmatpush1.msra.mxu0 %v101
    %296 = vmatprep.subr.mxu0 0.0
    %297 = vmatpush1.msra.mxu0 %v100
    %298 = vmatprep.subr.mxu0 0.0
    %299 = vmatpush1.msra.mxu0 %v99
    %300 = vmatprep.subr.mxu0 0.0
    %301 = vmatpush1.msra.mxu0 %v98
    %302 = vmatprep.subr.mxu0 0.0
    %303 = vmatpush1.msra.mxu0 %v97
    %304 = vmatprep.subr.mxu0 0.0
    %305 = vmatpush1.msra.mxu0 %v96
    %306 = vmatprep.subr.mxu0 0.0
    %307 = vmatpush1.msra.mxu0 %v95
    %308 = vmatprep.subr.mxu0 0.0
    %309 = vmatpush1.msra.mxu0 %v94
    %310 = vmatprep.subr.mxu0 0.0
    %311 = vmatpush1.msra.mxu0 %v93
    %312 = vmatprep.subr.mxu0 0.0
    %313 = vmatpush1.msra.mxu0 %v92
    %314 = vmatprep.subr.mxu0 0.0
    %315 = vmatpush1.msra.mxu0 %v91
    %316 = vmatprep.subr.mxu0 0.0
    %317 = vmatpush1.msra.mxu0 %v90
    %318 = vmatprep.subr.mxu0 0.0
    %319 = vmatpush1.msra.mxu0 %v89
    %320 = vmatprep.subr.mxu0 0.0
    %321 = vmatpush2.msra.mxu0 %v120
    %322 = vmatprep.subr.mxu0 0.0
    %323 = vmatpush2.msra.mxu0 %v119
    %324 = vmatprep.subr.mxu0 0.0
    %325 = vmatpush2.msra.mxu0 %v118
    %326 = vmatprep.subr.mxu0 0.0
    %327 = vmatpush2.msra.mxu0 %v117
    %328 = vmatprep.subr.mxu0 0.0
    %329 = vmatpush2.msra.mxu0 %v116
    %330 = vmatprep.subr.mxu0 0.0
    %331 = vmatpush2.msra.mxu0 %v115
    %332 = vmatprep.subr.mxu0 0.0
    %333 = vmatpush2.msra.mxu0 %v114
    %334 = vmatprep.subr.mxu0 0.0
    %335 = vmatpush2.msra.mxu0 %v113
    %336 = vmatprep.subr.mxu0 0.0
    %337 = vmatpush2.msra.mxu0 %v112
    %338 = vmatprep.subr.mxu0 0.0
    %339 = vmatpush2.msra.mxu0 %v111
    %340 = vmatprep.subr.mxu0 0.0
    %341 = vmatpush2.msra.mxu0 %v110
    %342 = vmatprep.subr.mxu0 0.0
    %343 = vmatpush2.msra.mxu0 %v109
    %344 = vmatprep.subr.mxu0 0.0
    %345 = vmatpush2.msra.mxu0 %v108
    %346 = vmatprep.subr.mxu0 0.0
    %347 = vmatpush2.msra.mxu0 %v107
    %348 = vmatprep.subr.mxu0 0.0
    %349 = vmatpush2.msra.mxu0 %v106
    %350 = vmatprep.subr.mxu0 0.0
    %351 = vmatpush2.msra.mxu0 %v105
    %352 = vmatprep.mubr.f32.mxu0 %v50
    %353 = vmatmul.mubr.f32.gmra.mxu0 %v49
    %v354 = vpop.f32.mrf.mxu0
    %v355 = vadd.f32 %v285, %v354
    %v356 = vpop.f32.mrf.mxu0
    %357 = vdwg.mxu0
    %358 = vmatprep.subr.mxu0 0.0
    %359 = vmatpush1.msra.mxu0 %v136
    %360 = vmatprep.subr.mxu0 0.0
    %361 = vmatpush1.msra.mxu0 %v135
    %362 = vmatprep.subr.mxu0 0.0
    %363 = vmatpush1.msra.mxu0 %v134
    %364 = vmatprep.subr.mxu0 0.0
    %365 = vmatpush1.msra.mxu0 %v133
    %366 = vmatprep.subr.mxu0 0.0
    %367 = vmatpush1.msra.mxu0 %v132
    %368 = vmatprep.subr.mxu0 0.0
    %369 = vmatpush1.msra.mxu0 %v131
    %370 = vmatprep.subr.mxu0 0.0
    %371 = vmatpush1.msra.mxu0 %v130
    %372 = vmatprep.subr.mxu0 0.0
    %373 = vmatpush1.msra.mxu0 %v129
    %374 = vmatprep.subr.mxu0 0.0
    %375 = vmatpush1.msra.mxu0 %v128
    %376 = vmatprep.subr.mxu0 0.0
    %377 = vmatpush1.msra.mxu0 %v127
    %378 = vmatprep.subr.mxu0 0.0
    %379 = vmatpush1.msra.mxu0 %v126
    %380 = vmatprep.subr.mxu0 0.0
    %381 = vmatpush1.msra.mxu0 %v125
    %382 = vmatprep.subr.mxu0 0.0
    %383 = vmatpush1.msra.mxu0 %v124
    %384 = vmatprep.subr.mxu0 0.0
    %385 = vmatpush1.msra.mxu0 %v123
    %386 = vmatprep.subr.mxu0 0.0
    %387 = vmatpush1.msra.mxu0 %v122
    %388 = vmatprep.subr.mxu0 0.0
    %389 = vmatpush1.msra.mxu0 %v121
    %390 = vmatprep.subr.mxu0 0.0
    %391 = vmatpush2.msra.mxu0 %v152
    %392 = vmatprep.subr.mxu0 0.0
    %393 = vmatpush2.msra.mxu0 %v151
    %394 = vmatprep.subr.mxu0 0.0
    %395 = vmatpush2.msra.mxu0 %v150
    %396 = vmatprep.subr.mxu0 0.0
    %397 = vmatpush2.msra.mxu0 %v149
    %398 = vmatprep.subr.mxu0 0.0
    %399 = vmatpush2.msra.mxu0 %v148
    %400 = vmatprep.subr.mxu0 0.0
    %401 = vmatpush2.msra.mxu0 %v147
    %402 = vmatprep.subr.mxu0 0.0
    %403 = vmatpush2.msra.mxu0 %v146
    %404 = vmatprep.subr.mxu0 0.0
    %405 = vmatpush2.msra.mxu0 %v145
    %406 = vmatprep.subr.mxu0 0.0
    %407 = vmatpush2.msra.mxu0 %v144
    %408 = vmatprep.subr.mxu0 0.0
    %409 = vmatpush2.msra.mxu0 %v143
    %410 = vmatprep.subr.mxu0 0.0
    %411 = vmatpush2.msra.mxu0 %v142
    %412 = vmatprep.subr.mxu0 0.0
    %413 = vmatpush2.msra.mxu0 %v141
    %414 = vmatprep.subr.mxu0 0.0
    %415 = vmatpush2.msra.mxu0 %v140
    %416 = vmatprep.subr.mxu0 0.0
    %417 = vmatpush2.msra.mxu0 %v139
    %418 = vmatprep.subr.mxu0 0.0
    %419 = vmatpush2.msra.mxu0 %v138
    %420 = vmatprep.subr.mxu0 0.0
    %421 = vmatpush2.msra.mxu0 %v137
    %422 = vmatprep.mubr.f32.mxu0 %v52
    %423 = vmatmul.mubr.f32.gmra.mxu0 %v51
    %v424 = vpop.f32.mrf.mxu0
    %v425 = vadd.f32 %v355, %v424
    %v426 = vpop.f32.mrf.mxu0
    %427 = vdwg.mxu0
    %428 = vmatprep.subr.mxu0 0.0
    %429 = vmatpush1.msra.mxu0 %v168
    %430 = vmatprep.subr.mxu0 0.0
    %431 = vmatpush1.msra.mxu0 %v167
    %432 = vmatprep.subr.mxu0 0.0
    %433 = vmatpush1.msra.mxu0 %v166
    %434 = vmatprep.subr.mxu0 0.0
    %435 = vmatpush1.msra.mxu0 %v165
    %436 = vmatprep.subr.mxu0 0.0
    %437 = vmatpush1.msra.mxu0 %v164
    %438 = vmatprep.subr.mxu0 0.0
    %439 = vmatpush1.msra.mxu0 %v163
    %440 = vmatprep.subr.mxu0 0.0
    %441 = vmatpush1.msra.mxu0 %v162
    %442 = vmatprep.subr.mxu0 0.0
    %443 = vmatpush1.msra.mxu0 %v161
    %444 = vmatprep.subr.mxu0 0.0
    %445 = vmatpush1.msra.mxu0 %v160
    %446 = vmatprep.subr.mxu0 0.0
    %447 = vmatpush1.msra.mxu0 %v159
    %448 = vmatprep.subr.mxu0 0.0
    %449 = vmatpush1.msra.mxu0 %v158
    %450 = vmatprep.subr.mxu0 0.0
    %451 = vmatpush1.msra.mxu0 %v157
    %452 = vmatprep.subr.mxu0 0.0
    %453 = vmatpush1.msra.mxu0 %v156
    %454 = vmatprep.subr.mxu0 0.0
    %455 = vmatpush1.msra.mxu0 %v155
    %456 = vmatprep.subr.mxu0 0.0
    %457 = vmatpush1.msra.mxu0 %v154
    %458 = vmatprep.subr.mxu0 0.0
    %459 = vmatpush1.msra.mxu0 %v153
    %460 = vmatprep.subr.mxu0 0.0
    %461 = vmatpush2.msra.mxu0 %v184
    %462 = vmatprep.subr.mxu0 0.0
    %463 = vmatpush2.msra.mxu0 %v183
    %464 = vmatprep.subr.mxu0 0.0
    %465 = vmatpush2.msra.mxu0 %v182
    %466 = vmatprep.subr.mxu0 0.0
    %467 = vmatpush2.msra.mxu0 %v181
    %468 = vmatprep.subr.mxu0 0.0
    %469 = vmatpush2.msra.mxu0 %v180
    %470 = vmatprep.subr.mxu0 0.0
    %471 = vmatpush2.msra.mxu0 %v179
    %472 = vmatprep.subr.mxu0 0.0
    %473 = vmatpush2.msra.mxu0 %v178
    %474 = vmatprep.subr.mxu0 0.0
    %475 = vmatpush2.msra.mxu0 %v177
    %476 = vmatprep.subr.mxu0 0.0
    %477 = vmatpush2.msra.mxu0 %v176
    %478 = vmatprep.subr.mxu0 0.0
    %479 = vmatpush2.msra.mxu0 %v175
    %480 = vmatprep.subr.mxu0 0.0
    %481 = vmatpush2.msra.mxu0 %v174
    %482 = vmatprep.subr.mxu0 0.0
    %483 = vmatpush2.msra.mxu0 %v173
    %484 = vmatprep.subr.mxu0 0.0
    %485 = vmatpush2.msra.mxu0 %v172
    %486 = vmatprep.subr.mxu0 0.0
    %487 = vmatpush2.msra.mxu0 %v171
    %488 = vmatprep.subr.mxu0 0.0
    %489 = vmatpush2.msra.mxu0 %v170
    %490 = vmatprep.subr.mxu0 0.0
    %491 = vmatpush2.msra.mxu0 %v169
    %492 = vmatprep.mubr.f32.mxu0 %v54
    %493 = vmatmul.mubr.f32.gmra.mxu0 %v53
    %v494 = vpop.f32.mrf.mxu0
    %v495 = vadd.f32 %v425, %v494
    %v496 = vpop.f32.mrf.mxu0
    %497 = vdwg.mxu0
    %498 = vmatprep.subr.mxu0 0.0
    %499 = vmatpush1.msra.mxu0 %v200
    %500 = vmatprep.subr.mxu0 0.0
    %501 = vmatpush1.msra.mxu0 %v199
    %502 = vmatprep.subr.mxu0 0.0
    %503 = vmatpush1.msra.mxu0 %v198
    %504 = vmatprep.subr.mxu0 0.0
    %505 = vmatpush1.msra.mxu0 %v197
    %506 = vmatprep.subr.mxu0 0.0
    %507 = vmatpush1.msra.mxu0 %v196
    %508 = vmatprep.subr.mxu0 0.0
    %509 = vmatpush1.msra.mxu0 %v195
    %510 = vmatprep.subr.mxu0 0.0
    %511 = vmatpush1.msra.mxu0 %v194
    %512 = vmatprep.subr.mxu0 0.0
    %513 = vmatpush1.msra.mxu0 %v193
    %514 = vmatprep.subr.mxu0 0.0
    %515 = vmatpush1.msra.mxu0 %v192
    %516 = vmatprep.subr.mxu0 0.0
    %517 = vmatpush1.msra.mxu0 %v191
    %518 = vmatprep.subr.mxu0 0.0
    %519 = vmatpush1.msra.mxu0 %v190
    %520 = vmatprep.subr.mxu0 0.0
    %521 = vmatpush1.msra.mxu0 %v189
    %522 = vmatprep.subr.mxu0 0.0
    %523 = vmatpush1.msra.mxu0 %v188
    %524 = vmatprep.subr.mxu0 0.0
    %525 = vmatpush1.msra.mxu0 %v187
    %526 = vmatprep.subr.mxu0 0.0
    %527 = vmatpush1.msra.mxu0 %v186
    %528 = vmatprep.subr.mxu0 0.0
    %529 = vmatpush1.msra.mxu0 %v185
    %530 = vmatprep.subr.mxu0 0.0
    %531 = vmatpush2.msra.mxu0 0.0
    %532 = vmatprep.subr.mxu0 0.0
    %533 = vmatpush2.msra.mxu0 0.0
    %534 = vmatprep.subr.mxu0 0.0
    %535 = vmatpush2.msra.mxu0 0.0
    %536 = vmatprep.subr.mxu0 0.0
    %537 = vmatpush2.msra.mxu0 0.0
    %538 = vmatprep.subr.mxu0 0.0
    %539 = vmatpush2.msra.mxu0 0.0
    %540 = vmatprep.subr.mxu0 0.0
    %541 = vmatpush2.msra.mxu0 0.0
    %542 = vmatprep.subr.mxu0 0.0
    %543 = vmatpush2.msra.mxu0 0.0
    %544 = vmatprep.subr.mxu0 0.0
    %545 = vmatpush2.msra.mxu0 0.0
    %546 = vmatprep.subr.mxu0 0.0
    %547 = vmatpush2.msra.mxu0 0.0
    %548 = vmatprep.subr.mxu0 0.0
    %549 = vmatpush2.msra.mxu0 0.0
    %550 = vmatprep.subr.mxu0 0.0
    %551 = vmatpush2.msra.mxu0 %v206
    %552 = vmatprep.subr.mxu0 0.0
    %553 = vmatpush2.msra.mxu0 %v205
    %554 = vmatprep.subr.mxu0 0.0
    %555 = vmatpush2.msra.mxu0 %v204
    %556 = vmatprep.subr.mxu0 0.0
    %557 = vmatpush2.msra.mxu0 %v203
    %558 = vmatprep.subr.mxu0 0.0
    %559 = vmatpush2.msra.mxu0 %v202
    %560 = vmatprep.subr.mxu0 0.0
    %561 = vmatpush2.msra.mxu0 %v201
    %562 = vmatprep.mubr.f32.mxu0 %v216
    %563 = vmatmul.mubr.f32.gmra.mxu0 %v55
    %v564 = vpop.f32.mrf.mxu0
    %v565 = vadd.f32 %v495, %v564
    %v566 = vpop.f32.mrf.mxu0
    %567 = vdwg.mxu0
    %vm568 = vcmp.gt.f32.partialorder %v565, 0.0
    %v569 = vmul.f32 %v565, 0.01
    %v570 = vsel %vm568, %v565, %v569
    %v571 = vld [vmem:[%s3] sm:$0x1]
    %v573 = vlaneseq
    %v574 = vshrl.u32 %v573, 7
    %v575 = vsub.s32 0, %v574
    %v576 = vrot.slane %v571, %v575
    %v578 = vmul.f32 %v570, %v576
    %579 = vadd.xlane.f32.xlu0 %v578
    %v580 = vpop.xlane.xlu0 %579
    %s581 = sld [smem:[#allocation2]]
    %v582 = vstv %s581
    %v583 = vadd.f32 %v580, %v582
    %vm584 = vcmask 7168
    %585 = vst.msk [vmem:[%s5] sm:$0xff] %vm584, %v583
    // Predicated region
    $region30: #{domain_classifier_mlp_forward.1} parent=1 // pred_check
      _
    $region31: #{domain_classifier_mlp_forward.1} parent=1 // pred_check_branch
      %587 = sbr.rel (0) target = $region33
    $region32: #{domain_classifier_mlp_forward.1} parent=1 // pred_region
      _
    $region33: #{domain_classifier_mlp_forward.1} parent=1 // pred_fallthru
      _
    // Predicated region
    $region34: #{domain_classifier_mlp_forward.1} parent=1 // pred_check
      _
    $region35: #{domain_classifier_mlp_forward.1} parent=1 // pred_check_branch
      %589 = sbr.rel (0) target = $region37
    $region36: #{domain_classifier_mlp_forward.1} parent=1 // pred_region
      _
    $region37: #{domain_classifier_mlp_forward.1} parent=1 // pred_fallthru
      _
    %590 = vsyncpa [#allocation4], 1
    %591 = vsyncpa [#allocation6], 1

</llo_original>
